<compile_context>
chip_gen: v5e
topology: v5e:2x2
jax: 0.10.0
libtpu: 0.0.40
codegen_flags: <defaults>
</compile_context>

<pallas_src>
import functools

import jax
import jax.numpy as jnp
from jax.experimental import pallas as pl
from jax.experimental.pallas import tpu as pltpu

_SUBLANE = 8
_LANE = 128


def _round_up(x, m):
    return ((x + m - 1) // m) * m


def _pick_tile(dim, unit, cap):
    """Tile size (multiple of `unit`, <= cap) minimizing padding waste, then
    minimizing the number of grid blocks (i.e. preferring larger tiles)."""
    dim_aligned = _round_up(dim, unit)
    cap = max(unit, min(cap, dim_aligned))
    best_t, best_key = unit, None
    t = unit
    while t <= cap:
        padded = _round_up(dim, t)
        key = (padded, padded // t)
        if best_key is None or key < best_key:
            best_key, best_t = key, t
        t += unit
    return best_t


def _plan(B, D_in, D_out, tm=None, tn=None, tk=None):
    k_aligned = _round_up(D_in, _LANE)
    if tk is None:
        # Collapse the K grid axis whenever the whole padded reduction fits a
        # single block -> no accumulator revisit, no per-K-step grid overhead.
        tk = k_aligned if k_aligned <= 2048 else _pick_tile(D_in, _LANE, 1024)
    if tm is None:
        tm = _pick_tile(B, _SUBLANE, 512)
    if tn is None:
        tn = _pick_tile(D_out, _LANE, 1024)

    assert tm % _SUBLANE == 0, "tm must be a multiple of 8"
    assert tn % _LANE == 0, "tn must be a multiple of 128"
    assert tk % _LANE == 0, "tk must be a multiple of 128"

    Bp = _round_up(B, tm)
    Np = _round_up(D_out, tn)
    Kp = _round_up(D_in, tk)

    # v7x shards the "parallel" grid axes across its 2 TensorCores; if a large
    # problem would expose only one (M, N) block, split M so both cores work.
    if Bp // tm == 1 and Np // tn == 1 and tm > _SUBLANE and 2 * Bp * Np * Kp >= (1 << 24):
        tm = _round_up((tm + 1) // 2, _SUBLANE)
        Bp = _round_up(B, tm)

    return tm, tn, tk, Bp, Np, Kp


def _linear_kernel_single_k(x_ref, w_ref, b_ref, o_ref):
    # x_ref: (tm, Kp)  w_ref: (Kp, tn)  b_ref: (1, tn)  o_ref: (tm, tn)
    acc = jnp.dot(x_ref[...], w_ref[...], preferred_element_type=jnp.float32)
    o_ref[...] = (acc + b_ref[...].astype(jnp.float32)).astype(o_ref.dtype)


def _linear_kernel_multi_k(x_ref, w_ref, b_ref, o_ref, acc_ref):
    # x_ref: (tm, tk)  w_ref: (tk, tn)  b_ref: (1, tn)  o_ref/acc_ref: (tm, tn)
    k = pl.program_id(2)

    @pl.when(k == 0)
    def _():
        # Bias folded into the K=0 accumulator init (no separate epilogue add).
        acc_ref[...] = jnp.broadcast_to(
            b_ref[...].astype(jnp.float32), acc_ref.shape)

    acc_ref[...] += jnp.dot(
        x_ref[...], w_ref[...], preferred_element_type=jnp.float32)

    @pl.when(k == pl.num_programs(2) - 1)
    def _():
        o_ref[...] = acc_ref[...].astype(o_ref.dtype)


def _linear_pallas(x_p, wt_p, b_p, out_dtype, tm, tn, tk):
    Bp, Kp = x_p.shape
    Np = wt_p.shape[1]
    m_blocks, n_blocks, k_blocks = Bp // tm, Np // tn, Kp // tk

    # Explicit VMEM budget: double-buffered x/W/bias/out tiles (+ f32 acc).
    itemsize = max(jnp.dtype(x_p.dtype).itemsize, jnp.dtype(out_dtype).itemsize)
    vmem_bytes = 2 * itemsize * (tm * tk + tk * tn + tn + tm * tn)
    if k_blocks > 1:
        vmem_bytes += 4 * tm * tn
    vmem_limit = int(min(max(vmem_bytes + (4 << 20), 16 << 20), 48 << 20))

    cost = pl.CostEstimate(
        flops=2 * Bp * Np * Kp,
        transcendentals=0,
        bytes_accessed=int(
            x_p.size * jnp.dtype(x_p.dtype).itemsize * n_blocks
            + wt_p.size * jnp.dtype(wt_p.dtype).itemsize * m_blocks
            + b_p.size * 4 * m_blocks
            + Bp * Np * jnp.dtype(out_dtype).itemsize),
    )

    if k_blocks == 1:
        return pl.pallas_call(
            _linear_kernel_single_k,
            out_shape=jax.ShapeDtypeStruct((Bp, Np), out_dtype),
            grid_spec=pltpu.PrefetchScalarGridSpec(
                num_scalar_prefetch=0,
                grid=(m_blocks, n_blocks),
                in_specs=[
                    pl.BlockSpec((tm, Kp), lambda i, j: (i, 0)),   # x
                    pl.BlockSpec((Kp, tn), lambda i, j: (0, j)),   # W^T
                    pl.BlockSpec((1, tn), lambda i, j: (0, j)),    # bias
                ],
                out_specs=pl.BlockSpec((tm, tn), lambda i, j: (i, j)),
            ),
            compiler_params=pltpu.CompilerParams(
                dimension_semantics=("parallel", "parallel"),
                vmem_limit_bytes=vmem_limit),
            cost_estimate=cost,
        )(x_p, wt_p, b_p)

    return pl.pallas_call(
        _linear_kernel_multi_k,
        out_shape=jax.ShapeDtypeStruct((Bp, Np), out_dtype),
        grid_spec=pltpu.PrefetchScalarGridSpec(
            num_scalar_prefetch=0,
            grid=(m_blocks, n_blocks, k_blocks),
            in_specs=[
                pl.BlockSpec((tm, tk), lambda i, j, k: (i, k)),   # x
                pl.BlockSpec((tk, tn), lambda i, j, k: (k, j)),   # W^T
                pl.BlockSpec((1, tn), lambda i, j, k: (0, j)),    # bias
            ],
            out_specs=pl.BlockSpec((tm, tn), lambda i, j, k: (i, j)),
            scratch_shapes=[pltpu.VMEM((tm, tn), jnp.float32)],
        ),
        compiler_params=pltpu.CompilerParams(
            dimension_semantics=("parallel", "parallel", "arbitrary"),
            vmem_limit_bytes=vmem_limit),
        cost_estimate=cost,
    )(x_p, wt_p, b_p)


def linear(x, weight, bias, *, tm=None, tn=None, tk=None, compute_dtype=None,
           force_pallas=False, min_macs_for_pallas=1 << 21):
    """y = x @ weight.T + bias (PyTorch nn.Linear semantics).

    x: (B, D_in), weight: (D_out, D_in), bias: (D_out,)  ->  (B, D_out)
    compute_dtype: optional operand dtype for the MXU (e.g. jnp.bfloat16 on
        v6e/v7x); accumulation stays f32 and output keeps x.dtype.
    """
    B, D_in = x.shape
    D_out, d_in_w = weight.shape
    assert d_in_w == D_in, "weight shape must be (D_out, D_in)"

    # Tiny-problem fast path: kernel launch + pad/transpose/slice dispatches
    # dominate; plain XLA is faster.  (The demo forces the Pallas path.)
    if not force_pallas and B * D_in * D_out < min_macs_for_pallas:
        return (x @ weight.T + bias).astype(x.dtype)

    tm, tn, tk, Bp, Np, Kp = _plan(B, D_in, D_out, tm, tn, tk)

    op_dtype = compute_dtype if compute_dtype is not None else x.dtype
    # Transpose + pad once (fused/folded by XLA when this wrapper is jitted).
    wt_p = jnp.pad(weight.T, ((0, Kp - D_in), (0, Np - D_out))).astype(op_dtype)
    b_p = jnp.pad(bias, (0, Np - D_out)).reshape(1, Np).astype(jnp.float32)
    x_p = jnp.pad(x, ((0, Bp - B), (0, Kp - D_in))).astype(op_dtype)

    out_p = _linear_pallas(x_p, wt_p, b_p, x.dtype, tm, tn, tk)
    return out_p[:B, :D_out]


if __name__ == "__main__":
    key = jax.random.PRNGKey(0)
    kx, kw, kb = jax.random.split(key, 3)

    batch = 8
    input_size = 32
    output_size = 16

    x = jax.random.normal(kx, (batch, input_size), dtype=jnp.float32)
    # Deterministic init matching nn.Linear shapes: weight (out, in), bias (out,)
    bound = 1.0 / (input_size ** 0.5)
    weight = jax.random.uniform(
        kw, (output_size, input_size), minval=-bound, maxval=bound,
        dtype=jnp.float32)
    bias = jax.random.uniform(
        kb, (output_size,), minval=-bound, maxval=bound, dtype=jnp.float32)

    # jit the whole wrapper so transpose/pad/slice fold around the kernel;
    # force_pallas=True so the Pallas kernel (not the tiny-shape XLA fast
    # path) is actually exercised.
    linear_fn = jax.jit(functools.partial(linear, force_pallas=True))

    y = linear_fn(x, weight, bias)
    jax.block_until_ready(y)

    # Correctness check against plain JAX reference.
    y_ref = x @ weight.T + bias
    assert jnp.allclose(y, y_ref, atol=1e-5, rtol=1e-5), "mismatch vs reference"

    print("KERNEL_OK")
</pallas_src>

<mosaic_0001>
module attributes {stable_mosaic.version = 11 : i64} {
  func.func @_linear_kernel_single_k(%arg0: i32, %arg1: i32, %arg2: memref<8x128xf32, #tpu.memory_space<vmem>>, %arg3: memref<128x128xf32, #tpu.memory_space<vmem>>, %arg4: memref<1x128xf32, #tpu.memory_space<vmem>>, %arg5: memref<8x128xf32, #tpu.memory_space<vmem>>) attributes {dimension_semantics = [#tpu.dimension_semantics<parallel>, #tpu.dimension_semantics<parallel>], iteration_bounds = array<i64: 1, 1>, scalar_prefetch = 0 : i64, scratch_operands = 0 : i64, tpu.core_type = #tpu.core_type<tc>, window_params = [{transform_indices = @transform_0, window_bounds = array<i64: 8, 128>}, {transform_indices = @transform_1, window_bounds = array<i64: 128, 128>}, {transform_indices = @transform_2, window_bounds = array<i64: 1, 128>}, {transform_indices = @transform_3, window_bounds = array<i64: 8, 128>}]} {
    %c0 = arith.constant 0 : index
    %c0_0 = arith.constant 0 : index
    %0 = vector.load %arg2[%c0, %c0_0] : memref<8x128xf32, #tpu.memory_space<vmem>>, vector<8x128xf32>
    %c0_1 = arith.constant 0 : index
    %c0_2 = arith.constant 0 : index
    %1 = vector.load %arg3[%c0_1, %c0_2] : memref<128x128xf32, #tpu.memory_space<vmem>>, vector<128x128xf32>
    %cst = arith.constant dense<0.000000e+00> : vector<8x128xf32>
    %2 = tpu.matmul %0, %1, %cst {dimension_numbers = #tpu.dot_dimension_numbers<[1], [0], [0], [1], [0, 0, 1, 1], [], []>} : vector<8x128xf32>, vector<128x128xf32>, vector<8x128xf32> -> vector<8x128xf32>
    %c0_3 = arith.constant 0 : index
    %c0_4 = arith.constant 0 : index
    %3 = vector.load %arg4[%c0_3, %c0_4] : memref<1x128xf32, #tpu.memory_space<vmem>>, vector<1x128xf32>
    %4 = vector.broadcast %3 : vector<1x128xf32> to vector<8x128xf32>
    %5 = arith.addf %2, %4 : vector<8x128xf32>
    %c0_5 = arith.constant 0 : index
    %c0_6 = arith.constant 0 : index
    %6 = vector.load %arg5[%c0_5, %c0_6] : memref<8x128xf32, #tpu.memory_space<vmem>>, vector<8x128xf32>
    tpu.vector_store %arg5[%c0_5, %c0_6], %5 {strides = array<i32>} : memref<8x128xf32, #tpu.memory_space<vmem>>, vector<8x128xf32>,
    return
  }
  func.func @transform_0(%arg0: i32, %arg1: i32) -> (i32, i32) {
    %c0_i32 = arith.constant 0 : i32
    %c0_i32_0 = arith.constant 0 : i32
    return %arg0, %c0_i32 : i32, i32
  }
  func.func @transform_1(%arg0: i32, %arg1: i32) -> (i32, i32) {
    %c0_i32 = arith.constant 0 : i32
    %c0_i32_0 = arith.constant 0 : i32
    return %c0_i32, %arg1 : i32, i32
  }
  func.func @transform_2(%arg0: i32, %arg1: i32) -> (i32, i32) {
    %c0_i32 = arith.constant 0 : i32
    %c0_i32_0 = arith.constant 0 : i32
    return %c0_i32, %arg1 : i32, i32
  }
  func.func @transform_3(%arg0: i32, %arg1: i32) -> (i32, i32) {
    %c0_i32 = arith.constant 0 : i32
    return %arg0, %arg1 : i32, i32
  }
}

</mosaic_0001>

<llo_original>
// kernel: linear.1
$region0: #{linear.1}
  #allocation0 [shape = 'u32[]', space=smem, size = 0x4, offset = 0x4, fixed_abs, tag = 'smem constant byte address 0x4 - core index']
  #allocation1 [shape = 'u32[72,128]{1,0:T(1,128)}', space=vmem, size = 0x9000, scoped, tag = 'internal scratch']
  %s0 = inlined_call_operand.vmem [shape: f32[8,128], index: 0, kind: input, shape index: {}]
  %s1 = inlined_call_operand.vmem [shape: f32[128,128], index: 1, kind: input, shape index: {}]
  %s2 = inlined_call_operand.vmem [shape: f32[1,128], index: 2, kind: input, shape index: {}]
  %s3 = inlined_call_operand.hbm [shape: f32[8,128], index: 3, kind: output, shape index: {}]
  %s4 = sld [smem:[#allocation0]]
  $region22: #{linear.1} parent=0
    _
  %s6 = ssub.s32 1, %s4
  %s7 = scalar_select 0, %s6, %s4
  $region1: #{linear.1} parent=0
    #allocation2 [shape = 'u8[4096]{0}', space=vmem, size = 0x1000, scoped, tag = 'output window, operand 0, single buffered']
    #allocation3 [shape = 's32[1]{0}', space=sflag, size = 0x4, scoped, tag = 'scoped memory for linear.1']
    %8 = vsyncpa [#allocation3], 0
    // Predicated region
    $region2: #{linear.1} parent=1 // pred_check
      _
    $region3: #{linear.1} parent=1 // pred_check_branch
      %10 = sbr.rel (0) target = $region5
    $region4: #{linear.1} parent=1 // pred_region
      _
    $region5: #{linear.1} parent=1 // pred_fallthru
      _
    // Predicated region
    $region6: #{linear.1} parent=1 // pred_check
      _
    $region7: #{linear.1} parent=1 // pred_check_branch
      %12 = sbr.rel (0) target = $region9
    $region8: #{linear.1} parent=1 // pred_region
      _
    $region9: #{linear.1} parent=1 // pred_fallthru
      _
    // Predicated region
    $region10: #{linear.1} parent=1 // pred_check
      _
    $region11: #{linear.1} parent=1 // pred_check_branch
      %14 = sbr.rel (0) target = $region13
    $region12: #{linear.1} parent=1 // pred_region
      _
    $region13: #{linear.1} parent=1 // pred_fallthru
      _
    %v15 = vld [vmem:[%s0] sm:$0xff]
    %v16 = vld [vmem:[%s1] sm:$0xff]
    %v17 = vld [vmem:[%s1 + $0x8] sm:$0xff]
    %v18 = vld [vmem:[%s1 + $0x10] sm:$0xff]
    %v19 = vld [vmem:[%s1 + $0x18] sm:$0xff]
    %v20 = vld [vmem:[%s1 + $0x20] sm:$0xff]
    %v21 = vld [vmem:[%s1 + $0x28] sm:$0xff]
    %v22 = vld [vmem:[%s1 + $0x30] sm:$0xff]
    %v23 = vld [vmem:[%s1 + $0x38] sm:$0xff]
    %v24 = vld [vmem:[%s1 + $0x40] sm:$0xff]
    %v25 = vld [vmem:[%s1 + $0x48] sm:$0xff]
    %v26 = vld [vmem:[%s1 + $0x50] sm:$0xff]
    %v27 = vld [vmem:[%s1 + $0x58] sm:$0xff]
    %v28 = vld [vmem:[%s1 + $0x60] sm:$0xff]
    %v29 = vld [vmem:[%s1 + $0x68] sm:$0xff]
    %v30 = vld [vmem:[%s1 + $0x70] sm:$0xff]
    %v31 = vld [vmem:[%s1 + $0x78] sm:$0xff]
    %v32 = vld [vmem:[%s2] sm:$0x1]
    %v34 = vperm.slane %v32, 0
    %36 = vmatpush.msra.mxu0 %v31
    %37 = vmatpush.msra.mxu0 %v30
    %38 = vmatpush.msra.mxu0 %v29
    %39 = vmatpush.msra.mxu0 %v28
    %40 = vmatpush.msra.mxu0 %v27
    %41 = vmatpush.msra.mxu0 %v26
    %42 = vmatpush.msra.mxu0 %v25
    %43 = vmatpush.msra.mxu0 %v24
    %44 = vmatpush.msra.mxu0 %v23
    %45 = vmatpush.msra.mxu0 %v22
    %46 = vmatpush.msra.mxu0 %v21
    %47 = vmatpush.msra.mxu0 %v20
    %48 = vmatpush.msra.mxu0 %v19
    %49 = vmatpush.msra.mxu0 %v18
    %50 = vmatpush.msra.mxu0 %v17
    %51 = vmatpush.msra.mxu0 %v16
    %52 = vmatmul.f32.gmra.mxu0 %v15
    %v53 = vpop.f32.mrf.mxu0
    %v54 = vadd.f32 %v34, %v53
    %55 = vdwg.mxu0
    %56 = vst [vmem:[#allocation2] sm:$0xff] %v54
    // Predicated region
    $region14: #{linear.1} parent=1 // pred_check
      _
    $region15: #{linear.1} parent=1 // pred_check_branch
      %58 = sbr.rel (0) target = $region17
    $region16: #{linear.1} parent=1 // pred_region
      %60 = vsyncadd [#allocation3], 0
      %s62 = sshll.u32 [#allocation2], 4
      %s63 = int_to_ptr.vmem [resolvable:$true] %s62
      %s64 = sshll.u32 %s3, 4
      %s65 = int_to_ptr.hbm [resolvable:$true] %s64
      %67 = dma.vmem_to_hbm [thread:$0]  %s63, 128, %s65, [#allocation3]
    $region17: #{linear.1} parent=1 // pred_fallthru
      _
    // Predicated region
    $region18: #{linear.1} parent=1 // pred_check
      _
    $region19: #{linear.1} parent=1 // pred_check_branch
      %69 = sbr.rel (0) target = $region21
    $region20: #{linear.1} parent=1 // pred_region
      %71 = dma.done [#allocation3], 128
    $region21: #{linear.1} parent=1 // pred_fallthru
      _
    %72 = vsyncpa [#allocation3], 1

</llo_original>
